<compile_context>
chip_gen: v6e
topology: v6e:2x2x1
jax: 0.10.0
libtpu: 0.0.40
codegen_flags: <defaults>
</compile_context>

<pallas_src>
import functools

import jax
import jax.numpy as jnp
from jax.experimental import pallas as pl
from jax.experimental.pallas import tpu as pltpu


def _round_up(x, m):
    return ((x + m - 1) // m) * m


def _pad_to(a, shape):
    pads = [(0, t - s) for s, t in zip(a.shape, shape)]
    if all(p == (0, 0) for p in pads):
        return a
    return jnp.pad(a, pads)


def adapter_kernel(x_ref, w1_ref, w2_ref, o_ref, *, residual_ratio, mxu_dtype):
    # x_ref: (tb, c_in_p)  w1_ref: (c_in_p, hidden_p)  w2_ref: (hidden_p, c_in_p)
    x = x_ref[...]                                  # original precision (residual path)
    # fc[0] + ReLU  -- bf16 operands into the MXU, f32 accumulation
    h = jnp.dot(x.astype(mxu_dtype), w1_ref[...],
                preferred_element_type=jnp.float32)
    h = jnp.maximum(h, 0.0)
    # fc[2] + ReLU
    a = jnp.dot(h.astype(mxu_dtype), w2_ref[...],
                preferred_element_type=jnp.float32)
    a = jnp.maximum(a, 0.0)
    # residual blend in f32: r * a + (1 - r) * x
    out = residual_ratio * a + (1.0 - residual_ratio) * x.astype(jnp.float32)
    o_ref[...] = out.astype(o_ref.dtype)


def adapter_forward(x, w1t, w2t, *, residual_ratio=0.2, batch_tile=512,
                    mxu_dtype=jnp.bfloat16, lane_multiple=128):
    """x: (N, c_in); w1t: (c_in, hidden); w2t: (hidden, c_in).

    w1t / w2t are pre-transposed nn.Linear weights so the kernel computes
    plain row-major matmuls on the MXU.
    """
    n, c_in = x.shape
    assert w1t.shape[0] == c_in
    hidden = w1t.shape[1]
    assert w2t.shape == (hidden, c_in)

    # Lane-dense padding of the feature dims (last dims -> multiples of 128).
    c_in_p = _round_up(c_in, lane_multiple)
    hidden_p = _round_up(hidden, lane_multiple)

    # Batch tile: multiple of 8 sublanes, clamped to the (padded) batch.
    tb = max(8, min(_round_up(batch_tile, 8), _round_up(n, 8)))
    n_p = _round_up(n, tb)

    x_p = _pad_to(x, (n_p, c_in_p))
    w1_p = _pad_to(w1t, (c_in_p, hidden_p)).astype(mxu_dtype)
    w2_p = _pad_to(w2t, (hidden_p, c_in_p)).astype(mxu_dtype)

    # VMEM estimate: double-buffered x/out tiles + pipeline-buffered weights.
    itemsize_x = jnp.dtype(x.dtype).itemsize
    itemsize_w = jnp.dtype(mxu_dtype).itemsize
    est = (2 * 2 * tb * c_in_p * itemsize_x            # x-in + out, double-buffered
           + 2 * 2 * c_in_p * hidden_p * itemsize_w    # w1 + w2 pipeline buffers
           + (2 << 20))                                # margin
    vmem_limit = min(est, 64 << 20) if est > (32 << 20) else None

    grid = (n_p // tb,)

    kernel = functools.partial(adapter_kernel,
                               residual_ratio=float(residual_ratio),
                               mxu_dtype=mxu_dtype)

    out_p = pl.pallas_call(
        kernel,
        out_shape=jax.ShapeDtypeStruct((n_p, c_in_p), x.dtype),
        grid_spec=pltpu.PrefetchScalarGridSpec(
            num_scalar_prefetch=0,
            grid=grid,
            in_specs=[
                pl.BlockSpec((tb, c_in_p), lambda i: (i, 0)),
                # Weights are grid-invariant (constant index_map). On v7x
                # (64 MiB VMEM) they could additionally be single-buffered via
                # pipeline_mode=pl.Buffered(1) if the footprint gets tight.
                pl.BlockSpec((c_in_p, hidden_p), lambda i: (0, 0)),
                pl.BlockSpec((hidden_p, c_in_p), lambda i: (0, 0)),
            ],
            out_specs=pl.BlockSpec((tb, c_in_p), lambda i: (i, 0)),
        ),
        compiler_params=pltpu.CompilerParams(
            dimension_semantics=("parallel",),
            vmem_limit_bytes=vmem_limit,
        ),
    )(x_p, w1_p, w2_p)

    # TODO(synk): for very large c_in (weights exceed VMEM even single-buffered),
    # add a second grid axis tiling w2t's output columns and slice the residual
    # x to the matching (tb, tn) block.
    return out_p[:n, :c_in]


def adapter_reference(x, w1t, w2t, residual_ratio=0.2):
    xf = x.astype(jnp.float32)
    h = jnp.maximum(xf @ w1t.astype(jnp.float32), 0.0)
    a = jnp.maximum(h @ w2t.astype(jnp.float32), 0.0)
    return (residual_ratio * a + (1.0 - residual_ratio) * xf).astype(x.dtype)


if __name__ == "__main__":
    # Small deterministic setup consistent with Adapter(c_in=32, reduction=4).
    key = jax.random.PRNGKey(0)
    k_x, k_w1, k_w2 = jax.random.split(key, 3)

    batch, c_in, reduction = 16, 32, 4
    hidden = c_in // reduction

    x = jax.random.normal(k_x, (batch, c_in), dtype=jnp.float32)
    # nn.Linear weights are (out_features, in_features); pass the transpose so
    # the kernel does x @ W1t and h @ W2t directly.
    w1 = jax.random.normal(k_w1, (hidden, c_in), dtype=jnp.float32) * 0.1
    w2 = jax.random.normal(k_w2, (c_in, hidden), dtype=jnp.float32) * 0.1
    w1t, w2t = w1.T, w2.T

    # batch_tile=8 -> grid of 2 steps even at this tiny size (exercises the
    # pipelined / parallel grid path); production sizes use the 512-row default.
    out = adapter_forward(x, w1t, w2t, batch_tile=8)
    out = jax.block_until_ready(out)

    ref = adapter_reference(x, w1t, w2t)
    assert out.shape == x.shape
    # bf16 MXU operands with f32 accumulation -> compare loosely vs f32 reference.
    assert jnp.allclose(out, ref, atol=1e-2, rtol=1e-2), float(
        jnp.max(jnp.abs(out.astype(jnp.float32) - ref.astype(jnp.float32))))

    print("KERNEL_OK")
</pallas_src>

<mosaic_0001>
module attributes {stable_mosaic.version = 11 : i64} {
  func.func @adapter_kernel(%arg0: i32, %arg1: memref<8x128xf32, #tpu.memory_space<vmem>>, %arg2: memref<128x128xbf16, #tpu.memory_space<vmem>>, %arg3: memref<128x128xbf16, #tpu.memory_space<vmem>>, %arg4: memref<8x128xf32, #tpu.memory_space<vmem>>) attributes {dimension_semantics = [#tpu.dimension_semantics<parallel>], iteration_bounds = array<i64: 2>, scalar_prefetch = 0 : i64, scratch_operands = 0 : i64, tpu.core_type = #tpu.core_type<tc>, window_params = [{transform_indices = @transform_0, window_bounds = array<i64: 8, 128>}, {pipeline_mode = #tpu.pipeline_mode<synchronous>, transform_indices = @transform_1, window_bounds = array<i64: 128, 128>}, {pipeline_mode = #tpu.pipeline_mode<synchronous>, transform_indices = @transform_2, window_bounds = array<i64: 128, 128>}, {transform_indices = @transform_3, window_bounds = array<i64: 8, 128>}]} {
    %c0 = arith.constant 0 : index
    %c0_0 = arith.constant 0 : index
    %0 = vector.load %arg1[%c0, %c0_0] : memref<8x128xf32, #tpu.memory_space<vmem>>, vector<8x128xf32>
    %1 = arith.truncf %0 : vector<8x128xf32> to vector<8x128xbf16>
    %c0_1 = arith.constant 0 : index
    %c0_2 = arith.constant 0 : index
    %2 = vector.load %arg2[%c0_1, %c0_2] : memref<128x128xbf16, #tpu.memory_space<vmem>>, vector<128x128xbf16>
    %cst = arith.constant dense<0.000000e+00> : vector<8x128xf32>
    %3 = tpu.matmul %1, %2, %cst {dimension_numbers = #tpu.dot_dimension_numbers<[1], [0], [0], [1], [0, 0, 1, 1], [], []>} : vector<8x128xbf16>, vector<128x128xbf16>, vector<8x128xf32> -> vector<8x128xf32>
    %cst_3 = arith.constant 0.000000e+00 : f32
    %4 = vector.broadcast %cst_3 : f32 to vector<8x128xf32>
    %5 = arith.maximumf %3, %4 : vector<8x128xf32>
    %6 = arith.truncf %5 : vector<8x128xf32> to vector<8x128xbf16>
    %c0_4 = arith.constant 0 : index
    %c0_5 = arith.constant 0 : index
    %7 = vector.load %arg3[%c0_4, %c0_5] : memref<128x128xbf16, #tpu.memory_space<vmem>>, vector<128x128xbf16>
    %cst_6 = arith.constant dense<0.000000e+00> : vector<8x128xf32>
    %8 = tpu.matmul %6, %7, %cst_6 {dimension_numbers = #tpu.dot_dimension_numbers<[1], [0], [0], [1], [0, 0, 1, 1], [], []>} : vector<8x128xbf16>, vector<128x128xbf16>, vector<8x128xf32> -> vector<8x128xf32>
    %cst_7 = arith.constant 0.000000e+00 : f32
    %9 = vector.broadcast %cst_7 : f32 to vector<8x128xf32>
    %10 = arith.maximumf %8, %9 : vector<8x128xf32>
    %cst_8 = arith.constant 2.000000e-01 : f32
    %11 = vector.broadcast %cst_8 : f32 to vector<8x128xf32>
    %12 = arith.mulf %11, %10 : vector<8x128xf32>
    %cst_9 = arith.constant 8.000000e-01 : f32
    %13 = vector.broadcast %cst_9 : f32 to vector<8x128xf32>
    %14 = arith.mulf %13, %0 : vector<8x128xf32>
    %15 = arith.addf %12, %14 : vector<8x128xf32>
    %c0_10 = arith.constant 0 : index
    %c0_11 = arith.constant 0 : index
    %16 = vector.load %arg4[%c0_10, %c0_11] : memref<8x128xf32, #tpu.memory_space<vmem>>, vector<8x128xf32>
    tpu.vector_store %arg4[%c0_10, %c0_11], %15 {strides = array<i32>} : memref<8x128xf32, #tpu.memory_space<vmem>>, vector<8x128xf32>,
    return
  }
  func.func @transform_0(%arg0: i32) -> (i32, i32) {
    %c0_i32 = arith.constant 0 : i32
    %c0_i32_0 = arith.constant 0 : i32
    return %arg0, %c0_i32 : i32, i32
  }
  func.func @transform_1(%arg0: i32) -> (i32, i32) {
    %c0_i32 = arith.constant 0 : i32
    %c0_i32_0 = arith.constant 0 : i32
    %c0_i32_1 = arith.constant 0 : i32
    return %c0_i32, %c0_i32_0 : i32, i32
  }
  func.func @transform_2(%arg0: i32) -> (i32, i32) {
    %c0_i32 = arith.constant 0 : i32
    %c0_i32_0 = arith.constant 0 : i32
    %c0_i32_1 = arith.constant 0 : i32
    return %c0_i32, %c0_i32_0 : i32, i32
  }
  func.func @transform_3(%arg0: i32) -> (i32, i32) {
    %c0_i32 = arith.constant 0 : i32
    %c0_i32_0 = arith.constant 0 : i32
    return %arg0, %c0_i32 : i32, i32
  }
}

</mosaic_0001>

<llo_original>
// kernel: tpu_custom_call.1
$region0: #{tpu_custom_call.1}
  #allocation0 [shape = 'u32[]', space=smem, size = 0x4, offset = 0x4, fixed_abs, tag = 'smem constant byte address 0x4 - core index']
  #allocation1 [shape = 'u32[144,128]{1,0:T(1,128)}', space=vmem, size = 0x12000, scoped, tag = 'internal scratch']
  %s0 = inlined_call_operand.hbm [shape: f32[16,128], index: 0, kind: input, shape index: {}]
  %s1 = inlined_call_operand.hbm [shape: bf16[128,128], index: 1, kind: input, shape index: {}]
  %s2 = inlined_call_operand.hbm [shape: bf16[128,128], index: 2, kind: input, shape index: {}]
  %s3 = inlined_call_operand.hbm [shape: f32[16,128], index: 3, kind: output, shape index: {}]
  %s4 = sld [smem:[#allocation0]]
  $region57: #{tpu_custom_call.1} parent=0
    _
  %s6 = ssub.s32 1, %s4
  %s7 = scalar_select 0, %s6, %s4
  $region1: #{tpu_custom_call.1} parent=0
    #allocation2 [shape = 'u8[8192]{0}', space=vmem, size = 0x2000, scoped, tag = 'input window, operand 0']
    #allocation3 [shape = 's32[2]{0}', space=sflag, size = 0x8, scoped, tag = 'scoped memory for tpu_custom_call.1']
    #allocation4 [shape = 's32[2]{0}', space=sflag, size = 0x8, scoped, tag = 'scoped memory for tpu_custom_call.1']
    #allocation5 [shape = 'u8[32768]{0}', space=vmem, size = 0x8000, scoped, tag = 'input window, operand 1, single buffered']
    #allocation6 [shape = 's32[1]{0}', space=sflag, size = 0x4, scoped, tag = 'scoped memory for tpu_custom_call.1']
    #allocation7 [shape = 'u8[32768]{0}', space=vmem, size = 0x8000, scoped, tag = 'input window, operand 2, single buffered']
    #allocation8 [shape = 'u8[8192]{0}', space=vmem, size = 0x2000, scoped, tag = 'output window, operand 0']
    %8 = vsyncpa [#allocation3], 0
    %s9 = scalar_lea.sflag [#allocation3], 1
    %10 = vsyncpa %s9, 0
    %11 = vsyncpa [#allocation6], 0
    %12 = vsyncpa [#allocation4], 0
    %s13 = scalar_lea.sflag [#allocation4], 1
    %14 = vsyncpa %s13, 0
    loop: start=0, step=1, limit=4
    $region2: #{tpu_custom_call.1} parent=1 // loop_pre_header
      _
    $region3: #{tpu_custom_call.1} parent=1 // loop_header
      %s16 = sphi 0, %s20
      %p17 = scmp.ge.s32.totalorder %s16, 4
      %s26 = sphi 0, %s28
      %s29 = sphi 0, %s26
      %s30 = sphi 0, %s29
      %s46 = sphi 0, %s30
      %s50 = sphi 0, %s50
      %s52 = sphi 0, %s50
      %s53 = sphi 0, %s52
      %s67 = sphi 0, %s53
      %s71 = sphi 0, %s71
      %s73 = sphi 0, %s71
      %s74 = sphi 0, %s73
      %s88 = sphi 0, %s74
      %s94 = sphi 0, %s96
      %s97 = sphi 0, %s94
      %s98 = sphi 0, %s97
      %s114 = sphi 0, %s98
    $region4: #{tpu_custom_call.1} parent=1 // loop_header_branch
      %19 = sbr.rel (%p17) target = $region8
    $region5: #{tpu_custom_call.1} parent=1 // loop_body
      %s21 = ssub.s32 %s16, 1
      %s22 = ssub.s32 %s16, 2
      %s23 = sadd.s32 %s16, 1
      %s24 = ssub.s32 %s16, %s23
      %p25 = scmp.eq.s32.totalorder %s24, 0
      %s27 = sadd.s32 %s26, 1
      %s28 = scalar_select %p25, %s26, %s27
      %p31 = pneg %p25
      %p32 = scmp.eq.s32.totalorder %s16, 1
      %p33 = por %p31, %p32
      %p34 = scmp.ne.s32.totalorder %s26, %s29
      %p35 = scmp.eq.s32.totalorder %s16, 0
      %p36 = por %p34, %p35
      %p37 = scmp.ne.s32.totalorder %s26, %s29
      %p38 = scmp.eq.s32.totalorder %s21, 1
      %p39 = por %p37, %p38
      %p40 = scmp.ne.s32.totalorder %s29, %s30
      %p41 = scmp.eq.s32.totalorder %s21, 0
      %p42 = por %p40, %p41
      %p43 = scmp.ne.s32.totalorder %s29, %s30
      %p44 = scmp.eq.s32.totalorder %s22, 1
      %p45 = por %p43, %p44
      %p47 = scmp.ne.s32.totalorder %s30, %s46
      %p48 = scmp.eq.s32.totalorder %s22, 0
      %p49 = por %p47, %p48
      %s51 = sadd.s32 %s50, 1
      %p54 = scmp.eq.s32.totalorder %s16, 1
      %p55 = scmp.ne.s32.totalorder %s50, %s52
      %p56 = scmp.eq.s32.totalorder %s16, 0
      %p57 = por %p55, %p56
      %p58 = scmp.ne.s32.totalorder %s50, %s52
      %p59 = scmp.eq.s32.totalorder %s21, 1
      %p60 = por %p58, %p59
      %p61 = scmp.ne.s32.totalorder %s52, %s53
      %p62 = scmp.eq.s32.totalorder %s21, 0
      %p63 = por %p61, %p62
      %p64 = scmp.ne.s32.totalorder %s52, %s53
      %p65 = scmp.eq.s32.totalorder %s22, 1
      %p66 = por %p64, %p65
      %p68 = scmp.ne.s32.totalorder %s53, %s67
      %p69 = scmp.eq.s32.totalorder %s22, 0
      %p70 = por %p68, %p69
      %s72 = sadd.s32 %s71, 1
      %p75 = scmp.eq.s32.totalorder %s16, 1
      %p76 = scmp.ne.s32.totalorder %s71, %s73
      %p77 = scmp.eq.s32.totalorder %s16, 0
      %p78 = por %p76, %p77
      %p79 = scmp.ne.s32.totalorder %s71, %s73
      %p80 = scmp.eq.s32.totalorder %s21, 1
      %p81 = por %p79, %p80
      %p82 = scmp.ne.s32.totalorder %s73, %s74
      %p83 = scmp.eq.s32.totalorder %s21, 0
      %p84 = por %p82, %p83
      %p85 = scmp.ne.s32.totalorder %s73, %s74
      %p86 = scmp.eq.s32.totalorder %s22, 1
      %p87 = por %p85, %p86
      %p89 = scmp.ne.s32.totalorder %s74, %s88
      %p90 = scmp.eq.s32.totalorder %s22, 0
      %p91 = por %p89, %p90
      %s92 = ssub.s32 %s16, %s23
      %p93 = scmp.eq.s32.totalorder %s92, 0
      %s95 = sadd.s32 %s94, 1
      %s96 = scalar_select %p93, %s94, %s95
      %p99 = pneg %p93
      %p100 = scmp.eq.s32.totalorder %s16, 1
      %p101 = por %p99, %p100
      %p102 = scmp.ne.s32.totalorder %s94, %s97
      %p103 = scmp.eq.s32.totalorder %s16, 0
      %p104 = por %p102, %p103
      %p105 = scmp.ne.s32.totalorder %s94, %s97
      %p106 = scmp.eq.s32.totalorder %s21, 1
      %p107 = por %p105, %p106
      %p108 = scmp.ne.s32.totalorder %s97, %s98
      %p109 = scmp.eq.s32.totalorder %s21, 0
      %p110 = por %p108, %p109
      %p111 = scmp.ne.s32.totalorder %s97, %s98
      %p112 = scmp.eq.s32.totalorder %s22, 1
      %p113 = por %p111, %p112
      %p115 = scmp.ne.s32.totalorder %s98, %s114
      %p116 = scmp.eq.s32.totalorder %s22, 0
      %p117 = por %p115, %p116
      %p118 = scmp.le.s32.totalorder 1, %s16
      %p119 = scmp.lt.s32.totalorder %s16, 3
      %p120 = pnand %p118, %p119
      %p121 = pneg %p120
      // Predicated region
      $region9: #{tpu_custom_call.1} parent=5 // pred_check
        _
      $region10: #{tpu_custom_call.1} parent=5 // pred_check_branch
        %123 = sbr.rel (%p120) target = $region12
      $region11: #{tpu_custom_call.1} parent=5 // pred_region
        %s124 = ssub.s32 %s16, 1
        // Predicated region
        $region13: #{tpu_custom_call.1} parent=11 // pred_check
          %p125 = pneg %p63
        $region14: #{tpu_custom_call.1} parent=11 // pred_check_branch
          %127 = sbr.rel (%p125) target = $region16
        $region15: #{tpu_custom_call.1} parent=11 // pred_region
          %s129 = ssub.s32 1024, 1024
          %130 = vsyncadd [#allocation6], %s129
          %s131 = sshll.u32 [#allocation5], 4
          %s132 = int_to_ptr.vmem [resolvable:$true] %s131
          %137 = dma.hbm_to_vmem [thread:$0]  %s1, 1024, %s132, [#allocation6], 64, 64, 4
        $region16: #{tpu_custom_call.1} parent=11 // pred_fallthru
          _
        // Predicated region
        $region17: #{tpu_custom_call.1} parent=11 // pred_check
          %p138 = pneg %p84
        $region18: #{tpu_custom_call.1} parent=11 // pred_check_branch
          %140 = sbr.rel (%p138) target = $region20
        $region19: #{tpu_custom_call.1} parent=11 // pred_region
          %s142 = ssub.s32 1024, 1024
          %143 = vsyncadd [#allocation6], %s142
          %s144 = sshll.u32 [#allocation7], 4
          %s145 = int_to_ptr.vmem [resolvable:$true] %s144
          %150 = dma.hbm_to_vmem [thread:$0]  %s2, 1024, %s145, [#allocation6], 64, 64, 4
        $region20: #{tpu_custom_call.1} parent=11 // pred_fallthru
          _
      $region12: #{tpu_custom_call.1} parent=5 // pred_fallthru
        _
      %p151 = scmp.lt.s32.totalorder %s16, 2
      // Predicated region
      $region21: #{tpu_custom_call.1} parent=5 // pred_check
        %p152 = pneg %p151
      $region22: #{tpu_custom_call.1} parent=5 // pred_check_branch
        %154 = sbr.rel (%p152) target = $region24
      $region23: #{tpu_custom_call.1} parent=5 // pred_region
        // Predicated region
        $region25: #{tpu_custom_call.1} parent=23 // pred_check
          %p155 = pneg %p36
        $region26: #{tpu_custom_call.1} parent=23 // pred_check_branch
          %157 = sbr.rel (%p155) target = $region28
        $region27: #{tpu_custom_call.1} parent=23 // pred_region
          %s158 = sand.u32 %s26, 1
          %s159 = scalar_lea.sflag [#allocation3], %s158
          %s160 = sand.u32 %s26, 1
          %s161 = smul.addr %s160, 8
          %s162 = scalar_lea.vmem [#allocation2], %s161
          %s164 = ssub.s32 128, 128
          %165 = vsyncadd %s159, %s164
          %s166 = smul.addr %s16, 128
          %s167 = scalar_lea.hbm %s0, %s166
          %s169 = sshll.u32 %s162, 4
          %s170 = int_to_ptr.vmem [resolvable:$true] %s169
          %172 = dma.hbm_to_vmem [thread:$0]  %s167, 128, %s170, %s159
        $region28: #{tpu_custom_call.1} parent=23 // pred_fallthru
          _
      $region24: #{tpu_custom_call.1} parent=5 // pred_fallthru
        _
      %p173 = scmp.le.s32.totalorder 1, %s16
      %p174 = scmp.lt.s32.totalorder %s16, 3
      %p175 = pnand %p173, %p174
      %p176 = pneg %p175
      // Predicated region
      $region29: #{tpu_custom_call.1} parent=5 // pred_check
        _
      $region30: #{tpu_custom_call.1} parent=5 // pred_check_branch
        %178 = sbr.rel (%p175) target = $region32
      $region31: #{tpu_custom_call.1} parent=5 // pred_region
        %s179 = ssub.s32 %s16, 1
        %s180 = sand.u32 %s29, 1
        %s181 = scalar_lea.sflag [#allocation3], %s180
        %s182 = sand.u32 %s29, 1
        %s183 = smul.addr %s182, 8
        %s184 = scalar_lea.vmem [#allocation2], %s183
        // Predicated region
        $region33: #{tpu_custom_call.1} parent=31 // pred_check
          %p185 = pneg %p42
        $region34: #{tpu_custom_call.1} parent=31 // pred_check_branch
          %187 = sbr.rel (%p185) target = $region36
        $region35: #{tpu_custom_call.1} parent=31 // pred_region
          %188 = dma.done %s181, 128
        $region36: #{tpu_custom_call.1} parent=31 // pred_fallthru
          _
        // Predicated region
        $region37: #{tpu_custom_call.1} parent=31 // pred_check
          %p189 = pneg %p63
        $region38: #{tpu_custom_call.1} parent=31 // pred_check_branch
          %191 = sbr.rel (%p189) target = $region40
        $region39: #{tpu_custom_call.1} parent=31 // pred_region
          %192 = dma.done [#allocation6], 1024
        $region40: #{tpu_custom_call.1} parent=31 // pred_fallthru
          _
        // Predicated region
        $region41: #{tpu_custom_call.1} parent=31 // pred_check
          %p193 = pneg %p84
        $region42: #{tpu_custom_call.1} parent=31 // pred_check_branch
          %195 = sbr.rel (%p193) target = $region44
        $region43: #{tpu_custom_call.1} parent=31 // pred_region
          %196 = dma.done [#allocation6], 1024
        $region44: #{tpu_custom_call.1} parent=31 // pred_fallthru
          _
        %s197 = sand.u32 %s29, 1
        %s198 = scalar_lea.sflag [#allocation3], %s197
        %s199 = sand.u32 %s29, 1
        %s200 = smul.addr %s199, 8
        %s201 = scalar_lea.vmem [#allocation2], %s200
        %p202 = pneg %p42
        %p203 = pneg %p39
        %p204 = pneg %p63
        %p205 = pneg %p60
        %p206 = pneg %p84
        %p207 = pneg %p81
        %p208 = pneg %p110
        %p209 = pneg %p107
        %s210 = sand.u32 %s97, 1
        %s211 = scalar_lea.sflag [#allocation4], %s210
        %s212 = sand.u32 %s97, 1
        %s213 = smul.addr %s212, 8
        %s214 = scalar_lea.vmem [#allocation8], %s213
        %v216 = vld [vmem:[%s184] sm:$0xff]
        %v217 = vpack.c.bf16 %v216, %v216
        %v218 = vld [vmem:[#allocation5] sm:$0xf]
        %v219 = vld [vmem:[#allocation5 + $0x4] sm:$0xf]
        %v220 = vld [vmem:[#allocation5 + $0x8] sm:$0xf]
        %v221 = vld [vmem:[#allocation5 + $0xc] sm:$0xf]
        %v222 = vld [vmem:[#allocation5 + $0x10] sm:$0xf]
        %v223 = vld [vmem:[#allocation5 + $0x14] sm:$0xf]
        %v224 = vld [vmem:[#allocation5 + $0x18] sm:$0xf]
        %v225 = vld [vmem:[#allocation5 + $0x1c] sm:$0xf]
        %v226 = vld [vmem:[#allocation5 + $0x20] sm:$0xf]
        %v227 = vld [vmem:[#allocation5 + $0x24] sm:$0xf]
        %v228 = vld [vmem:[#allocation5 + $0x28] sm:$0xf]
        %v229 = vld [vmem:[#allocation5 + $0x2c] sm:$0xf]
        %v230 = vld [vmem:[#allocation5 + $0x30] sm:$0xf]
        %v231 = vld [vmem:[#allocation5 + $0x34] sm:$0xf]
        %v232 = vld [vmem:[#allocation5 + $0x38] sm:$0xf]
        %v233 = vld [vmem:[#allocation5 + $0x3c] sm:$0xf]
        %v250 = vunpack.c.l.b16 %v218
        %v251 = vunpack.c.l.b16 %v219
        %v252 = vunpack.c.l.b16 %v220
        %v253 = vunpack.c.l.b16 %v221
        %v254 = vunpack.c.l.b16 %v222
        %v255 = vunpack.c.l.b16 %v223
        %v256 = vunpack.c.l.b16 %v224
        %v257 = vunpack.c.l.b16 %v225
        %v258 = vunpack.c.l.b16 %v226
        %v259 = vunpack.c.l.b16 %v227
        %v260 = vunpack.c.l.b16 %v228
        %v261 = vunpack.c.l.b16 %v229
        %v262 = vunpack.c.l.b16 %v230
        %v263 = vunpack.c.l.b16 %v231
        %v264 = vunpack.c.l.b16 %v232
        %v265 = vunpack.c.l.b16 %v233
        %v266 = vpack.c.b16 %v251, %v250
        %v267 = vpack.c.b16 %v253, %v252
        %v268 = vpack.c.b16 %v255, %v254
        %v269 = vpack.c.b16 %v257, %v256
        %v270 = vpack.c.b16 %v259, %v258
        %v271 = vpack.c.b16 %v261, %v260
        %v272 = vpack.c.b16 %v263, %v262
        %v273 = vpack.c.b16 %v265, %v264
        %282 = vmatprep.subr.bf16.mxu0 0
        %283 = vmatpush1.bf16.msra.mxu0 %v273
        %284 = vmatprep.subr.bf16.mxu0 0
        %285 = vmatpush1.bf16.msra.mxu0 %v272
        %286 = vmatprep.subr.bf16.mxu0 0
        %287 = vmatpush1.bf16.msra.mxu0 %v271
        %288 = vmatprep.subr.bf16.mxu0 0
        %289 = vmatpush1.bf16.msra.mxu0 %v270
        %290 = vmatprep.subr.bf16.mxu0 0
        %291 = vmatpush1.bf16.msra.mxu0 %v269
        %292 = vmatprep.subr.bf16.mxu0 0
        %293 = vmatpush1.bf16.msra.mxu0 %v268
        %294 = vmatprep.subr.bf16.mxu0 0
        %295 = vmatpush1.bf16.msra.mxu0 %v267
        %296 = vmatprep.subr.bf16.mxu0 0
        %297 = vmatpush1.bf16.msra.mxu0 %v266
        %298 = vmatprep.subr.bf16.mxu0 0
        %299 = vmatpush2.bf16.msra.mxu0 0
        %300 = vmatprep.subr.bf16.mxu0 0
        %301 = vmatpush2.bf16.msra.mxu0 0
        %302 = vmatprep.subr.bf16.mxu0 0
        %303 = vmatpush2.bf16.msra.mxu0 0
        %304 = vmatprep.subr.bf16.mxu0 0
        %305 = vmatpush2.bf16.msra.mxu0 0
        %306 = vmatprep.subr.bf16.mxu0 0
        %307 = vmatpush2.bf16.msra.mxu0 0
        %308 = vmatprep.subr.bf16.mxu0 0
        %309 = vmatpush2.bf16.msra.mxu0 0
        %310 = vmatprep.subr.bf16.mxu0 0
        %311 = vmatpush2.bf16.msra.mxu0 0
        %312 = vmatprep.subr.bf16.mxu0 0
        %313 = vmatpush2.bf16.msra.mxu0 0
        %314 = vmatprep.mubr.bf16.mxu0 0
        %315 = vmatmul.mubr.bf16.gmra.mxu0 %v217
        %v316 = vpop.f32.mrf.mxu0
        %v317 = vadd.f32 0.0, %v316
        %v318 = vpop.f32.mrf.mxu0
        %v319 = vpop.f32.mrf.mxu0
        %v320 = vpop.f32.mrf.mxu0
        %321 = vdwg.mxu0
        %v322 = vmax.f32 %v317, 0.0
        %v323 = vpack.c.bf16 %v322, %v322
        %v324 = vld [vmem:[#allocation7] sm:$0xf]
        %v325 = vld [vmem:[#allocation7 + $0x4] sm:$0xf]
        %v326 = vld [vmem:[#allocation7 + $0x8] sm:$0xf]
        %v327 = vld [vmem:[#allocation7 + $0xc] sm:$0xf]
        %v328 = vld [vmem:[#allocation7 + $0x10] sm:$0xf]
        %v329 = vld [vmem:[#allocation7 + $0x14] sm:$0xf]
        %v330 = vld [vmem:[#allocation7 + $0x18] sm:$0xf]
        %v331 = vld [vmem:[#allocation7 + $0x1c] sm:$0xf]
        %v332 = vld [vmem:[#allocation7 + $0x20] sm:$0xf]
        %v333 = vld [vmem:[#allocation7 + $0x24] sm:$0xf]
        %v334 = vld [vmem:[#allocation7 + $0x28] sm:$0xf]
        %v335 = vld [vmem:[#allocation7 + $0x2c] sm:$0xf]
        %v336 = vld [vmem:[#allocation7 + $0x30] sm:$0xf]
        %v337 = vld [vmem:[#allocation7 + $0x34] sm:$0xf]
        %v338 = vld [vmem:[#allocation7 + $0x38] sm:$0xf]
        %v339 = vld [vmem:[#allocation7 + $0x3c] sm:$0xf]
        %v356 = vunpack.c.l.b16 %v324
        %v357 = vunpack.c.l.b16 %v325
        %v358 = vunpack.c.l.b16 %v326
        %v359 = vunpack.c.l.b16 %v327
        %v360 = vunpack.c.l.b16 %v328
        %v361 = vunpack.c.l.b16 %v329
        %v362 = vunpack.c.l.b16 %v330
        %v363 = vunpack.c.l.b16 %v331
        %v364 = vunpack.c.l.b16 %v332
        %v365 = vunpack.c.l.b16 %v333
        %v366 = vunpack.c.l.b16 %v334
        %v367 = vunpack.c.l.b16 %v335
        %v368 = vunpack.c.l.b16 %v336
        %v369 = vunpack.c.l.b16 %v337
        %v370 = vunpack.c.l.b16 %v338
        %v371 = vunpack.c.l.b16 %v339
        %v372 = vpack.c.b16 %v357, %v356
        %v373 = vpack.c.b16 %v359, %v358
        %v374 = vpack.c.b16 %v361, %v360
        %v375 = vpack.c.b16 %v363, %v362
        %v376 = vpack.c.b16 %v365, %v364
        %v377 = vpack.c.b16 %v367, %v366
        %v378 = vpack.c.b16 %v369, %v368
        %v379 = vpack.c.b16 %v371, %v370
        %388 = vmatprep.subr.bf16.mxu0 0
        %389 = vmatpush1.bf16.msra.mxu0 %v379
        %390 = vmatprep.subr.bf16.mxu0 0
        %391 = vmatpush1.bf16.msra.mxu0 %v378
        %392 = vmatprep.subr.bf16.mxu0 0
        %393 = vmatpush1.bf16.msra.mxu0 %v377
        %394 = vmatprep.subr.bf16.mxu0 0
        %395 = vmatpush1.bf16.msra.mxu0 %v376
        %396 = vmatprep.subr.bf16.mxu0 0
        %397 = vmatpush1.bf16.msra.mxu0 %v375
        %398 = vmatprep.subr.bf16.mxu0 0
        %399 = vmatpush1.bf16.msra.mxu0 %v374
        %400 = vmatprep.subr.bf16.mxu0 0
        %401 = vmatpush1.bf16.msra.mxu0 %v373
        %402 = vmatprep.subr.bf16.mxu0 0
        %403 = vmatpush1.bf16.msra.mxu0 %v372
        %404 = vmatprep.subr.bf16.mxu0 0
        %405 = vmatpush2.bf16.msra.mxu0 0
        %406 = vmatprep.subr.bf16.mxu0 0
        %407 = vmatpush2.bf16.msra.mxu0 0
        %408 = vmatprep.subr.bf16.mxu0 0
        %409 = vmatpush2.bf16.msra.mxu0 0
        %410 = vmatprep.subr.bf16.mxu0 0
        %411 = vmatpush2.bf16.msra.mxu0 0
        %412 = vmatprep.subr.bf16.mxu0 0
        %413 = vmatpush2.bf16.msra.mxu0 0
        %414 = vmatprep.subr.bf16.mxu0 0
        %415 = vmatpush2.bf16.msra.mxu0 0
        %416 = vmatprep.subr.bf16.mxu0 0
        %417 = vmatpush2.bf16.msra.mxu0 0
        %418 = vmatprep.subr.bf16.mxu0 0
        %419 = vmatpush2.bf16.msra.mxu0 0
        %420 = vmatprep.mubr.bf16.mxu0 0
        %421 = vmatmul.mubr.bf16.gmra.mxu0 %v323
        %v422 = vpop.f32.mrf.mxu0
        %v423 = vadd.f32 0.0, %v422
        %v424 = vpop.f32.mrf.mxu0
        %v425 = vpop.f32.mrf.mxu0
        %v426 = vpop.f32.mrf.mxu0
        %427 = vdwg.mxu0
        %v428 = vmax.f32 %v423, 0.0
        %v429 = vmul.f32 %v428, 0.2
        %v430 = vmul.f32 %v216, 0.8
        %v431 = vadd.f32 %v429, %v430
        %432 = vst [vmem:[%s214] sm:$0xff] %v431
        %s433 = sand.u32 %s97, 1
        %s434 = scalar_lea.sflag [#allocation4], %s433
        %s435 = sand.u32 %s97, 1
        %s436 = smul.addr %s435, 8
        %s437 = scalar_lea.vmem [#allocation8], %s436
        // Predicated region
        $region45: #{tpu_custom_call.1} parent=31 // pred_check
          %p438 = pneg %p107
        $region46: #{tpu_custom_call.1} parent=31 // pred_check_branch
          %440 = sbr.rel (%p438) target = $region48
        $region47: #{tpu_custom_call.1} parent=31 // pred_region
          %s442 = ssub.s32 128, 128
          %443 = vsyncadd %s434, %s442
          %s444 = smul.addr %s21, 128
          %s445 = scalar_lea.hbm %s3, %s444
          %s447 = sshll.u32 %s437, 4
          %s448 = int_to_ptr.vmem [resolvable:$true] %s447
          %450 = dma.vmem_to_hbm [thread:$0]  %s448, 128, %s445, %s434
        $region48: #{tpu_custom_call.1} parent=31 // pred_fallthru
          _
      $region32: #{tpu_custom_call.1} parent=5 // pred_fallthru
        _
      %p451 = scmp.le.s32.totalorder 2, %s16
      // Predicated region
      $region49: #{tpu_custom_call.1} parent=5 // pred_check
        %p452 = pneg %p451
      $region50: #{tpu_custom_call.1} parent=5 // pred_check_branch
        %454 = sbr.rel (%p452) target = $region52
      $region51: #{tpu_custom_call.1} parent=5 // pred_region
        %s455 = ssub.s32 %s16, 2
        // Predicated region
        $region53: #{tpu_custom_call.1} parent=51 // pred_check
          %p456 = pneg %p113
        $region54: #{tpu_custom_call.1} parent=51 // pred_check_branch
          %458 = sbr.rel (%p456) target = $region56
        $region55: #{tpu_custom_call.1} parent=51 // pred_region
          %s459 = sand.u32 %s98, 1
          %s460 = scalar_lea.sflag [#allocation4], %s459
          %s461 = sand.u32 %s98, 1
          %s462 = smul.addr %s461, 8
          %s463 = scalar_lea.vmem [#allocation8], %s462
          %464 = dma.done %s460, 128
        $region56: #{tpu_custom_call.1} parent=51 // pred_fallthru
          _
      $region52: #{tpu_custom_call.1} parent=5 // pred_fallthru
        _
    $region6: #{tpu_custom_call.1} parent=1 // loop_footer
      %s20 = sadd.s32 1, %s16
    $region7: #{tpu_custom_call.1} parent=1 // loop_footer_branch
      %15 = sbr.rel target = $region3
    $region8: #{tpu_custom_call.1} parent=1 // loop_exit
      _
    %465 = vsyncpa [#allocation3], 1
    %s466 = scalar_lea.sflag [#allocation3], 1
    %467 = vsyncpa %s466, 1
    %468 = vsyncpa [#allocation6], 1
    %469 = vsyncpa [#allocation4], 1
    %s470 = scalar_lea.sflag [#allocation4], 1
    %471 = vsyncpa %s470, 1

</llo_original>
